<compile_context>
chip_gen: v5e
topology: v5e:2x2
jax: 0.10.0
libtpu: 0.0.40
codegen_flags: <defaults>
</compile_context>

<pallas_src>
import jax
import jax.numpy as jnp
from jax.experimental import pallas as pl
from jax.experimental.pallas import tpu as pltpu


def _round_up(x, m):
    return (x + m - 1) // m * m


def _cnn_block_kernel(patches_ref, w_ref, shift_ref, o_ref):
    # Full-K contraction on the MXU with f32 accumulation (bf16 x bf16 -> f32).
    acc = jnp.dot(patches_ref[...], w_ref[...], preferred_element_type=jnp.float32)
    # Folded eval-mode BatchNorm shift + LeakyReLU(0.2); math stays in f32
    # (v5e has no bf16 VPU path), store is bf16 for half the HBM writeback.
    y = acc + shift_ref[...]
    o_ref[...] = jnp.maximum(y, 0.2 * y).astype(o_ref.dtype)


def cnn_forward(x, weight, gamma, beta, running_mean, running_var, eps=1e-5,
                nchw_output=True):
    """x: (N, C, H, W) f32; weight: (Cout, C, 4, 4); BN params: (Cout,).

    Returns bf16 activations, NCHW by default (set nchw_output=False to keep the
    kernel-native NHWC layout and skip one full-tensor transpose when chaining blocks).
    """
    N, C, H, W = x.shape
    Cout = weight.shape[0]
    Ho, Wo = H // 2, W // 2          # k=4, s=2, p=1  ->  H/2, W/2
    K = C * 16
    M = N * Ho * Wo

    # --- im2col, built once, directly in bf16, NHWC order ------------------------
    # Flattened K order is (c major, kh*4+kw minor), matching weight.reshape(Cout, C*16).
    x_nhwc = jnp.transpose(x, (0, 2, 3, 1)).astype(jnp.bfloat16)      # (N, H, W, C)
    xp = jnp.pad(x_nhwc, ((0, 0), (1, 1), (1, 1), (0, 0)), mode="reflect")
    cols = [xp[:, kh:kh + 2 * Ho:2, kw:kw + 2 * Wo:2, :]              # each (N, Ho, Wo, C)
            for kh in range(4) for kw in range(4)]
    patches = jnp.stack(cols, axis=-1).reshape(M, K)                  # bf16 (M, C*16)
    # TODO(synk): a fully in-kernel im2col (halo'd NHWC BlockSpec + 16 accumulating
    # (TM x C) x (C x Cout) matmuls) would avoid materializing the ~4x-inflated
    # overlapping-window patch matrix in HBM entirely; it is still built here.

    # --- fold eval-mode BatchNorm into the weight (scale) + a bias (shift) --------
    scale = gamma / jnp.sqrt(running_var + eps)                       # (Cout,)
    shift = (beta - running_mean * scale).astype(jnp.float32)         # (Cout,)
    w_mat = (weight.reshape(Cout, K) * scale[:, None]).T.astype(jnp.bfloat16)  # (K, Cout)

    # --- tiling: lane-dense Cout padding, full-K blocks, adaptive M tile ----------
    Np = _round_up(Cout, 128)            # lane-dense, unmasked vst output
    TN = min(256, Np)
    TM = min(1024, _round_up(M, 8))
    # keep double-buffered full-K patch tiles well inside the VMEM budget
    while TM > 16 and 2 * TM * K * 2 > 16 * 1024 * 1024:
        TM //= 2
    TM = max(8, _round_up(TM, 8))
    Mp = _round_up(M, TM)

    patches_p = patches if Mp == M else jnp.pad(patches, ((0, Mp - M), (0, 0)))
    w_p = w_mat if Np == Cout else jnp.pad(w_mat, ((0, 0), (0, Np - Cout)))
    shift_p = jnp.zeros((1, Np), jnp.float32).at[0, :Cout].set(shift)

    # VMEM budget estimate (double-buffered blocks), capped for v7x's 64 MiB.
    vmem_est = 2 * (TM * K * 2 + K * TN * 2 + TN * 4 + TM * TN * 2)
    vmem_limit = int(min(48 * 1024 * 1024, max(32 * 1024 * 1024, vmem_est * 2)))

    # Grid: Cout tiles OUTER, M tiles INNER -> the (K, TN) weight block index is
    # constant across the inner M sweep, so it is DMA'd once per Cout tile
    # (effectively VMEM-resident) instead of once per M tile.
    grid = (Np // TN, Mp // TM)
    out_flat = pl.pallas_call(
        _cnn_block_kernel,
        out_shape=jax.ShapeDtypeStruct((Mp, Np), jnp.bfloat16),
        grid_spec=pltpu.PrefetchScalarGridSpec(
            num_scalar_prefetch=0,
            grid=grid,
            in_specs=[
                pl.BlockSpec((TM, K), lambda j, i: (i, 0)),    # patches tile (full K)
                pl.BlockSpec((K, TN), lambda j, i: (0, j)),    # weight tile, resident over i
                pl.BlockSpec((1, TN), lambda j, i: (0, j)),    # folded-BN shift
            ],
            out_specs=pl.BlockSpec((TM, TN), lambda j, i: (i, j)),
        ),
        compiler_params=pltpu.CompilerParams(
            dimension_semantics=("parallel", "parallel"),
            vmem_limit_bytes=vmem_limit,
        ),
    )(patches_p, w_p, shift_p)

    # strip padding; kernel-native layout is NHWC
    out = out_flat[:M, :Cout].reshape(N, Ho, Wo, Cout)
    if nchw_output:
        out = out.transpose(0, 3, 1, 2)                               # (N, Cout, Ho, Wo)
    # TODO(synk): nn.Dropout(0.5) is applied as eval-mode identity; train-mode
    # stochastic masking (Bernoulli / 0.5 scaling) is not reproduced here.
    return out


def _reference(x, weight, gamma, beta, running_mean, running_var, eps=1e-5):
    """Pure-JAX f32 reference: reflect-pad conv(4,2) -> eval BN -> LeakyReLU(0.2)."""
    xp = jnp.pad(x, ((0, 0), (0, 0), (1, 1), (1, 1)), mode="reflect")
    y = jax.lax.conv_general_dilated(
        xp, weight, window_strides=(2, 2), padding="VALID",
        dimension_numbers=("NCHW", "OIHW", "NCHW"))
    scale = gamma / jnp.sqrt(running_var + eps)
    shift = beta - running_mean * scale
    y = y * scale[None, :, None, None] + shift[None, :, None, None]
    return jnp.where(y > 0, y, 0.2 * y)


if __name__ == "__main__":
    key = jax.random.PRNGKey(0)
    k_x, k_w, k_g, k_b, k_m, k_v = jax.random.split(key, 6)

    N, Cin, H, W = 2, 4, 16, 16
    Cout = 8

    x = jax.random.normal(k_x, (N, Cin, H, W), dtype=jnp.float32)
    weight = 0.1 * jax.random.normal(k_w, (Cout, Cin, 4, 4), dtype=jnp.float32)
    gamma = 1.0 + 0.1 * jax.random.normal(k_g, (Cout,), dtype=jnp.float32)
    beta = 0.1 * jax.random.normal(k_b, (Cout,), dtype=jnp.float32)
    running_mean = 0.05 * jax.random.normal(k_m, (Cout,), dtype=jnp.float32)
    running_var = 0.5 + jnp.abs(0.1 * jax.random.normal(k_v, (Cout,), dtype=jnp.float32))

    fwd = jax.jit(cnn_forward)
    out = fwd(x, weight, gamma, beta, running_mean, running_var)
    out = jax.block_until_ready(out)

    assert out.shape == (N, Cout, H // 2, W // 2)
    out_f32 = out.astype(jnp.float32)
    assert bool(jnp.all(jnp.isfinite(out_f32)))

    ref = _reference(x, weight, gamma, beta, running_mean, running_var)
    max_err = float(jnp.max(jnp.abs(out_f32 - ref)))
    assert max_err < 5e-2, f"max abs error {max_err}"

    print("KERNEL_OK")
</pallas_src>

<mosaic_0001>
module attributes {stable_mosaic.version = 11 : i64} {
  func.func @_cnn_block_kernel(%arg0: i32, %arg1: i32, %arg2: memref<128x64xbf16, #tpu.memory_space<vmem>>, %arg3: memref<64x128xbf16, #tpu.memory_space<vmem>>, %arg4: memref<1x128xf32, #tpu.memory_space<vmem>>, %arg5: memref<128x128xbf16, #tpu.memory_space<vmem>>) attributes {dimension_semantics = [#tpu.dimension_semantics<parallel>, #tpu.dimension_semantics<parallel>], iteration_bounds = array<i64: 1, 1>, scalar_prefetch = 0 : i64, scratch_operands = 0 : i64, tpu.core_type = #tpu.core_type<tc>, window_params = [{transform_indices = @transform_0, window_bounds = array<i64: 128, 64>}, {transform_indices = @transform_1, window_bounds = array<i64: 64, 128>}, {transform_indices = @transform_2, window_bounds = array<i64: 1, 128>}, {transform_indices = @transform_3, window_bounds = array<i64: 128, 128>}]} {
    %c0 = arith.constant 0 : index
    %c0_0 = arith.constant 0 : index
    %0 = vector.load %arg2[%c0, %c0_0] : memref<128x64xbf16, #tpu.memory_space<vmem>>, vector<128x64xbf16>
    %c0_1 = arith.constant 0 : index
    %c0_2 = arith.constant 0 : index
    %1 = vector.load %arg3[%c0_1, %c0_2] : memref<64x128xbf16, #tpu.memory_space<vmem>>, vector<64x128xbf16>
    %cst = arith.constant dense<0.000000e+00> : vector<128x128xf32>
    %2 = tpu.matmul %0, %1, %cst {dimension_numbers = #tpu.dot_dimension_numbers<[1], [0], [0], [1], [0, 0, 1, 1], [], []>} : vector<128x64xbf16>, vector<64x128xbf16>, vector<128x128xf32> -> vector<128x128xf32>
    %c0_3 = arith.constant 0 : index
    %c0_4 = arith.constant 0 : index
    %3 = vector.load %arg4[%c0_3, %c0_4] : memref<1x128xf32, #tpu.memory_space<vmem>>, vector<1x128xf32>
    %4 = vector.broadcast %3 : vector<1x128xf32> to vector<128x128xf32>
    %5 = arith.addf %2, %4 : vector<128x128xf32>
    %cst_5 = arith.constant 2.000000e-01 : f32
    %6 = vector.broadcast %cst_5 : f32 to vector<128x128xf32>
    %7 = arith.mulf %6, %5 : vector<128x128xf32>
    %8 = arith.maximumf %5, %7 : vector<128x128xf32>
    %9 = arith.truncf %8 : vector<128x128xf32> to vector<128x128xbf16>
    %c0_6 = arith.constant 0 : index
    %c0_7 = arith.constant 0 : index
    %10 = vector.load %arg5[%c0_6, %c0_7] : memref<128x128xbf16, #tpu.memory_space<vmem>>, vector<128x128xbf16>
    tpu.vector_store %arg5[%c0_6, %c0_7], %9 {strides = array<i32>} : memref<128x128xbf16, #tpu.memory_space<vmem>>, vector<128x128xbf16>,
    return
  }
  func.func @transform_0(%arg0: i32, %arg1: i32) -> (i32, i32) {
    %c0_i32 = arith.constant 0 : i32
    %c0_i32_0 = arith.constant 0 : i32
    return %arg1, %c0_i32 : i32, i32
  }
  func.func @transform_1(%arg0: i32, %arg1: i32) -> (i32, i32) {
    %c0_i32 = arith.constant 0 : i32
    %c0_i32_0 = arith.constant 0 : i32
    return %c0_i32, %arg0 : i32, i32
  }
  func.func @transform_2(%arg0: i32, %arg1: i32) -> (i32, i32) {
    %c0_i32 = arith.constant 0 : i32
    %c0_i32_0 = arith.constant 0 : i32
    return %c0_i32, %arg0 : i32, i32
  }
  func.func @transform_3(%arg0: i32, %arg1: i32) -> (i32, i32) {
    %c0_i32 = arith.constant 0 : i32
    return %arg1, %arg0 : i32, i32
  }
}

</mosaic_0001>

<llo_original>
// kernel: cnn_forward.1
$region0: #{cnn_forward.1}
  #allocation0 [shape = 'u32[]', space=smem, size = 0x4, offset = 0x4, fixed_abs, tag = 'smem constant byte address 0x4 - core index']
  #allocation1 [shape = 'u32[72,128]{1,0:T(1,128)}', space=vmem, size = 0x9000, scoped, tag = 'internal scratch']
  %s0 = inlined_call_operand.vmem [shape: bf16[128,64], index: 0, kind: input, shape index: {}]
  %s1 = inlined_call_operand.vmem [shape: bf16[64,128], index: 1, kind: input, shape index: {}]
  %s2 = inlined_call_operand.vmem [shape: f32[1,128], index: 2, kind: input, shape index: {}]
  %s3 = inlined_call_operand.vmem [shape: bf16[128,128], index: 3, kind: output, shape index: {}]
  %s4 = sld [smem:[#allocation0]]
  $region22: #{cnn_forward.1} parent=0
    _
  %s6 = ssub.s32 1, %s4
  %s7 = scalar_select 0, %s6, %s4
  // Predicated region
  $region2: #{cnn_forward.1} parent=0 // pred_check
    _
  $region3: #{cnn_forward.1} parent=0 // pred_check_branch
    %9 = sbr.rel (0) target = $region5
  $region4: #{cnn_forward.1} parent=0 // pred_region
    _
  $region5: #{cnn_forward.1} parent=0 // pred_fallthru
    _
  // Predicated region
  $region6: #{cnn_forward.1} parent=0 // pred_check
    _
  $region7: #{cnn_forward.1} parent=0 // pred_check_branch
    %11 = sbr.rel (0) target = $region9
  $region8: #{cnn_forward.1} parent=0 // pred_region
    _
  $region9: #{cnn_forward.1} parent=0 // pred_fallthru
    _
  // Predicated region
  $region10: #{cnn_forward.1} parent=0 // pred_check
    _
  $region11: #{cnn_forward.1} parent=0 // pred_check_branch
    %13 = sbr.rel (0) target = $region13
  $region12: #{cnn_forward.1} parent=0 // pred_region
    _
  $region13: #{cnn_forward.1} parent=0 // pred_fallthru
    _
  %v15 = vld [vmem:[%s0] sm:$0xf]
  %v16 = vld [vmem:[%s0 + $0x4] sm:$0xf]
  %v17 = vld [vmem:[%s0 + $0x8] sm:$0xf]
  %v18 = vld [vmem:[%s0 + $0xc] sm:$0xf]
  %v19 = vld [vmem:[%s0 + $0x10] sm:$0xf]
  %v20 = vld [vmem:[%s0 + $0x14] sm:$0xf]
  %v21 = vld [vmem:[%s0 + $0x18] sm:$0xf]
  %v22 = vld [vmem:[%s0 + $0x1c] sm:$0xf]
  %v23 = vld [vmem:[%s0 + $0x20] sm:$0xf]
  %v24 = vld [vmem:[%s0 + $0x24] sm:$0xf]
  %v25 = vld [vmem:[%s0 + $0x28] sm:$0xf]
  %v26 = vld [vmem:[%s0 + $0x2c] sm:$0xf]
  %v27 = vld [vmem:[%s0 + $0x30] sm:$0xf]
  %v28 = vld [vmem:[%s0 + $0x34] sm:$0xf]
  %v29 = vld [vmem:[%s0 + $0x38] sm:$0xf]
  %v30 = vld [vmem:[%s0 + $0x3c] sm:$0xf]
  %v31 = vld [vmem:[%s1] sm:$0xf]
  %v32 = vld [vmem:[%s1 + $0x4] sm:$0xf]
  %v33 = vld [vmem:[%s1 + $0x8] sm:$0xf]
  %v34 = vld [vmem:[%s1 + $0xc] sm:$0xf]
  %v35 = vld [vmem:[%s1 + $0x10] sm:$0xf]
  %v36 = vld [vmem:[%s1 + $0x14] sm:$0xf]
  %v37 = vld [vmem:[%s1 + $0x18] sm:$0xf]
  %v38 = vld [vmem:[%s1 + $0x1c] sm:$0xf]
  %v39 = vld [vmem:[%s2] sm:$0x1]
  %v41 = vperm.slane %v39, 0
  %v59 = vunpack.c.l.b16 %v15
  %v60 = vunpack.c.l.b16 %v16
  %v61 = vunpack.c.l.b16 %v17
  %v62 = vunpack.c.l.b16 %v18
  %v63 = vunpack.c.l.b16 %v19
  %v64 = vunpack.c.l.b16 %v20
  %v65 = vunpack.c.l.b16 %v21
  %v66 = vunpack.c.l.b16 %v22
  %v67 = vunpack.c.l.b16 %v23
  %v68 = vunpack.c.l.b16 %v24
  %v69 = vunpack.c.l.b16 %v25
  %v70 = vunpack.c.l.b16 %v26
  %v71 = vunpack.c.l.b16 %v27
  %v72 = vunpack.c.l.b16 %v28
  %v73 = vunpack.c.l.b16 %v29
  %v74 = vunpack.c.l.b16 %v30
  %v75 = vpack.c.b16 %v60, %v59
  %v76 = vpack.c.b16 %v62, %v61
  %v77 = vpack.c.b16 %v64, %v63
  %v78 = vpack.c.b16 %v66, %v65
  %v79 = vpack.c.b16 %v68, %v67
  %v80 = vpack.c.b16 %v70, %v69
  %v81 = vpack.c.b16 %v72, %v71
  %v82 = vpack.c.b16 %v74, %v73
  %v91 = vunpack.c.l.b16 %v31
  %v92 = vunpack.c.l.b16 %v32
  %v93 = vunpack.c.l.b16 %v33
  %v94 = vunpack.c.l.b16 %v34
  %v95 = vunpack.c.l.b16 %v35
  %v96 = vunpack.c.l.b16 %v36
  %v97 = vunpack.c.l.b16 %v37
  %v98 = vunpack.c.l.b16 %v38
  %v99 = vpack.c.b16 %v92, %v91
  %v100 = vpack.c.b16 %v94, %v93
  %v101 = vpack.c.b16 %v96, %v95
  %v102 = vpack.c.b16 %v98, %v97
  %vm107 = vcmask 523264
  %v109 = vsel %vm107, %v75, 0
  %v112 = vsel %vm107, %v76, 0
  %v115 = vsel %vm107, %v77, 0
  %v118 = vsel %vm107, %v78, 0
  %v121 = vsel %vm107, %v79, 0
  %v124 = vsel %vm107, %v80, 0
  %v127 = vsel %vm107, %v81, 0
  %v130 = vsel %vm107, %v82, 0
  %132 = vmatpush.bf16.msra.mxu0 0
  %133 = vmatpush.bf16.msra.mxu0 0
  %134 = vmatpush.bf16.msra.mxu0 0
  %135 = vmatpush.bf16.msra.mxu0 0
  %136 = vmatpush.bf16.msra.mxu0 %v102
  %137 = vmatpush.bf16.msra.mxu0 %v101
  %138 = vmatpush.bf16.msra.mxu0 %v100
  %139 = vmatpush.bf16.msra.mxu0 %v99
  %140 = vmatmul.bf16.gmra.mxu0 %v109
  %v141 = vpop.f32.mrf.mxu0
  %v142 = vadd.f32 %v41, %v141
  %v143 = vpop.f32.mrf.mxu0
  %v144 = vadd.f32 %v41, %v143
  %145 = vmatmul.bf16.gmra.mxu0 %v112
  %v146 = vpop.f32.mrf.mxu0
  %v147 = vadd.f32 %v41, %v146
  %v148 = vpop.f32.mrf.mxu0
  %v149 = vadd.f32 %v41, %v148
  %150 = vmatmul.bf16.gmra.mxu0 %v115
  %v151 = vpop.f32.mrf.mxu0
  %v152 = vadd.f32 %v41, %v151
  %v153 = vpop.f32.mrf.mxu0
  %v154 = vadd.f32 %v41, %v153
  %155 = vmatmul.bf16.gmra.mxu0 %v118
  %v156 = vpop.f32.mrf.mxu0
  %v157 = vadd.f32 %v41, %v156
  %v158 = vpop.f32.mrf.mxu0
  %v159 = vadd.f32 %v41, %v158
  %160 = vmatmul.bf16.gmra.mxu0 %v121
  %v161 = vpop.f32.mrf.mxu0
  %v162 = vadd.f32 %v41, %v161
  %v163 = vpop.f32.mrf.mxu0
  %v164 = vadd.f32 %v41, %v163
  %165 = vmatmul.bf16.gmra.mxu0 %v124
  %v166 = vpop.f32.mrf.mxu0
  %v167 = vadd.f32 %v41, %v166
  %v168 = vpop.f32.mrf.mxu0
  %v169 = vadd.f32 %v41, %v168
  %170 = vmatmul.bf16.gmra.mxu0 %v127
  %v171 = vpop.f32.mrf.mxu0
  %v172 = vadd.f32 %v41, %v171
  %v173 = vpop.f32.mrf.mxu0
  %v174 = vadd.f32 %v41, %v173
  %175 = vmatmul.bf16.gmra.mxu0 %v130
  %v176 = vpop.f32.mrf.mxu0
  %v177 = vadd.f32 %v41, %v176
  %v178 = vpop.f32.mrf.mxu0
  %v179 = vadd.f32 %v41, %v178
  %180 = vdwg.mxu0
  %v181 = vmul.f32 %v142, 0.2
  %v182 = vmul.f32 %v144, 0.2
  %v183 = vmul.f32 %v147, 0.2
  %v184 = vmul.f32 %v149, 0.2
  %v185 = vmul.f32 %v152, 0.2
  %v186 = vmul.f32 %v154, 0.2
  %v187 = vmul.f32 %v157, 0.2
  %v188 = vmul.f32 %v159, 0.2
  %v189 = vmul.f32 %v162, 0.2
  %v190 = vmul.f32 %v164, 0.2
  %v191 = vmul.f32 %v167, 0.2
  %v192 = vmul.f32 %v169, 0.2
  %v193 = vmul.f32 %v172, 0.2
  %v194 = vmul.f32 %v174, 0.2
  %v195 = vmul.f32 %v177, 0.2
  %v196 = vmul.f32 %v179, 0.2
  %v197 = vmax.f32 %v142, %v181
  %v198 = vmax.f32 %v144, %v182
  %v199 = vmax.f32 %v147, %v183
  %v200 = vmax.f32 %v149, %v184
  %v201 = vmax.f32 %v152, %v185
  %v202 = vmax.f32 %v154, %v186
  %v203 = vmax.f32 %v157, %v187
  %v204 = vmax.f32 %v159, %v188
  %v205 = vmax.f32 %v162, %v189
  %v206 = vmax.f32 %v164, %v190
  %v207 = vmax.f32 %v167, %v191
  %v208 = vmax.f32 %v169, %v192
  %v209 = vmax.f32 %v172, %v193
  %v210 = vmax.f32 %v174, %v194
  %v211 = vmax.f32 %v177, %v195
  %v212 = vmax.f32 %v179, %v196
  %v213 = vpack.c.bf16 %v197, %v197
  %v214 = vpack.c.bf16 %v198, %v198
  %v215 = vpack.c.bf16 %v199, %v199
  %v216 = vpack.c.bf16 %v200, %v200
  %v217 = vpack.c.bf16 %v201, %v201
  %v218 = vpack.c.bf16 %v202, %v202
  %v219 = vpack.c.bf16 %v203, %v203
  %v220 = vpack.c.bf16 %v204, %v204
  %v221 = vpack.c.bf16 %v205, %v205
  %v222 = vpack.c.bf16 %v206, %v206
  %v223 = vpack.c.bf16 %v207, %v207
  %v224 = vpack.c.bf16 %v208, %v208
  %v225 = vpack.c.bf16 %v209, %v209
  %v226 = vpack.c.bf16 %v210, %v210
  %v227 = vpack.c.bf16 %v211, %v211
  %v228 = vpack.c.bf16 %v212, %v212
  %229 = vst [vmem:[%s3] sm:$0xf] %v213
  %230 = vst [vmem:[%s3 + $0x4] sm:$0xf] %v214
  %231 = vst [vmem:[%s3 + $0x8] sm:$0xf] %v215
  %232 = vst [vmem:[%s3 + $0xc] sm:$0xf] %v216
  %233 = vst [vmem:[%s3 + $0x10] sm:$0xf] %v217
  %234 = vst [vmem:[%s3 + $0x14] sm:$0xf] %v218
  %235 = vst [vmem:[%s3 + $0x18] sm:$0xf] %v219
  %236 = vst [vmem:[%s3 + $0x1c] sm:$0xf] %v220
  %237 = vst [vmem:[%s3 + $0x20] sm:$0xf] %v221
  %238 = vst [vmem:[%s3 + $0x24] sm:$0xf] %v222
  %239 = vst [vmem:[%s3 + $0x28] sm:$0xf] %v223
  %240 = vst [vmem:[%s3 + $0x2c] sm:$0xf] %v224
  %241 = vst [vmem:[%s3 + $0x30] sm:$0xf] %v225
  %242 = vst [vmem:[%s3 + $0x34] sm:$0xf] %v226
  %243 = vst [vmem:[%s3 + $0x38] sm:$0xf] %v227
  %244 = vst [vmem:[%s3 + $0x3c] sm:$0xf] %v228
  // Predicated region
  $region14: #{cnn_forward.1} parent=0 // pred_check
    _
  $region15: #{cnn_forward.1} parent=0 // pred_check_branch
    %246 = sbr.rel (0) target = $region17
  $region16: #{cnn_forward.1} parent=0 // pred_region
    _
  $region17: #{cnn_forward.1} parent=0 // pred_fallthru
    _
  // Predicated region
  $region18: #{cnn_forward.1} parent=0 // pred_check
    _
  $region19: #{cnn_forward.1} parent=0 // pred_check_branch
    %248 = sbr.rel (0) target = $region21
  $region20: #{cnn_forward.1} parent=0 // pred_region
    _
  $region21: #{cnn_forward.1} parent=0 // pred_fallthru
    _

</llo_original>
